<compile_context>
chip_gen: v6e
topology: v6e:2x2x1
jax: 0.10.0
libtpu: 0.0.40
codegen_flags: <defaults>
</compile_context>

<pallas_src>
import jax
import jax.numpy as jnp
from jax.experimental import pallas as pl
from jax.experimental.pallas import tpu as pltpu

_SMALL_BYTES = 512 * 1024  # below this a single block / single grid step is fine


def _round_up(v, m):
    return ((v + m - 1) // m) * m


def _squared_relu_kernel(x_ref, o_ref):
    x = x_ref[...]
    r = jnp.maximum(x, 0)
    o_ref[...] = r * r


def _hw_config():
    """Generation-aware (per_block_bytes, vmem_limit_bytes).

    v7x:    64 MiB VMEM/TC but ~3.2 TB/s HBM -> bigger blocks to amortize the
            ~0.35 us per-step overhead, scoped VMEM capped at 48 MiB (headroom
            below the 64 MiB physical).
    v5e/v6e: 128 MiB VMEM, 0.82-1.4 TB/s HBM -> 8 MiB blocks, 40 MiB scoped
            VMEM (covers double-buffered in+out; v5e default scoped is 16 MiB).
    """
    try:
        vmem_cap = int(pltpu.get_tpu_info().vmem_capacity_bytes)
    except Exception:  # conservative fallback if the query is unavailable
        vmem_cap = 128 << 20
    if vmem_cap <= (64 << 20):          # v7x-class chip
        return 10 << 20, 48 << 20
    return 8 << 20, 40 << 20            # v5e / v6e


def squared_relu(x, *, donate_input=False):
    """Elementwise squared ReLU: (max(x, 0))**2, any shape / numeric dtype."""
    orig_shape = x.shape
    dtype = x.dtype
    n = x.size
    if n == 0:
        return x

    itemsize = jnp.dtype(dtype).itemsize
    block_bytes, vmem_limit = _hw_config()
    # dtype-native sublane tile: 8 for f32, 16 for bf16/f16, 32 for int8/fp8.
    sublane = max(8, 32 // itemsize)

    compiler_params = pltpu.CompilerParams(
        dimension_semantics=("parallel",),  # shardable across v7x's 2 TensorCores
        vmem_limit_bytes=vmem_limit,
    )
    io_alias = {0: 0} if donate_input else {}

    if n % 128 == 0:
        # ---- Regular path: lane-dense 2D slab (rows, width). ----
        width = next(w for w in (1024, 512, 256, 128) if n % w == 0)
        rows = n // width
        slab = x.reshape(rows, width)

        if rows * width * itemsize <= _SMALL_BYTES:
            # Truly tiny: one full-extent block (legal even if rows % 8 != 0).
            block_rows, grid = rows, (1,)
        else:
            # Cap the block at ~block_bytes but force >= ~4 grid steps so the
            # pipeline overlaps DMA-in / compute / DMA-out and the grid can be
            # split across both TensorCores on v7x.
            block_rows = max(
                sublane, (block_bytes // (width * itemsize)) // sublane * sublane)
            block_rows = min(block_rows, _round_up(pl.cdiv(rows, 4), sublane))
            grid = (pl.cdiv(rows, block_rows),)  # boundary block masked by Pallas

        out = pl.pallas_call(
            _squared_relu_kernel,
            out_shape=jax.ShapeDtypeStruct((rows, width), dtype),
            grid_spec=pltpu.PrefetchScalarGridSpec(
                num_scalar_prefetch=0,
                grid=grid,
                in_specs=[pl.BlockSpec((block_rows, width), lambda i: (i, 0))],
                out_specs=pl.BlockSpec((block_rows, width), lambda i: (i, 0)),
            ),
            compiler_params=compiler_params,
            input_output_aliases=io_alias,
        )(slab)
        return out.reshape(orig_shape)

    # ---- Irregular path (n % 128 != 0): keep the array 1D; Pallas masks the
    # final partial block.  Exactly one HBM read + one HBM write -- no
    # wrapper-side jnp.pad / [:n] slice (each would be a full extra HBM pass).
    flat = x.reshape(-1)
    if n * itemsize <= _SMALL_BYTES:
        block_elems, grid = n, (1,)  # full-extent 1D block is always legal
    else:
        lane_tile = 128 * sublane
        block_elems = max(lane_tile,
                          (block_bytes // itemsize) // lane_tile * lane_tile)
        block_elems = min(block_elems, _round_up(pl.cdiv(n, 4), lane_tile))
        grid = (pl.cdiv(n, block_elems),)  # last block masked by Pallas

    out = pl.pallas_call(
        _squared_relu_kernel,
        out_shape=jax.ShapeDtypeStruct((n,), dtype),
        grid_spec=pltpu.PrefetchScalarGridSpec(
            num_scalar_prefetch=0,
            grid=grid,
            in_specs=[pl.BlockSpec((block_elems,), lambda i: (i,))],
            out_specs=pl.BlockSpec((block_elems,), lambda i: (i,)),
        ),
        compiler_params=compiler_params,
        input_output_aliases=io_alias,
    )(flat)
    return out.reshape(orig_shape)


def squared_relu_ref(x):
    return jnp.square(jnp.maximum(x, 0))


if __name__ == "__main__":
    key = jax.random.PRNGKey(0)
    # SquaredReLU has no parameters; example input matches NCHW conv activations.
    x = jax.random.normal(key, (2, 4, 16, 16), dtype=jnp.float32)

    y = squared_relu(x)
    jax.block_until_ready(y)

    y_ref = squared_relu_ref(x)
    assert y.shape == x.shape and y.dtype == x.dtype
    assert jnp.allclose(y, y_ref, atol=1e-6, rtol=1e-6)

    print("KERNEL_OK")
</pallas_src>

<mosaic_0001>
module attributes {stable_mosaic.version = 11 : i64} {
  func.func @_squared_relu_kernel(%arg0: i32, %arg1: memref<2x1024xf32, #tpu.memory_space<vmem>>, %arg2: memref<2x1024xf32, #tpu.memory_space<vmem>>) attributes {dimension_semantics = [#tpu.dimension_semantics<parallel>], iteration_bounds = array<i64: 1>, scalar_prefetch = 0 : i64, scratch_operands = 0 : i64, tpu.core_type = #tpu.core_type<tc>, window_params = [{transform_indices = @transform_0, window_bounds = array<i64: 2, 1024>}, {transform_indices = @transform_1, window_bounds = array<i64: 2, 1024>}]} {
    %c0 = arith.constant 0 : index
    %c0_0 = arith.constant 0 : index
    %0 = vector.load %arg1[%c0, %c0_0] : memref<2x1024xf32, #tpu.memory_space<vmem>>, vector<2x1024xf32>
    %cst = arith.constant 0.000000e+00 : f32
    %1 = vector.broadcast %cst : f32 to vector<2x1024xf32>
    %2 = arith.maximumf %0, %1 : vector<2x1024xf32>
    %3 = arith.mulf %2, %2 : vector<2x1024xf32>
    %c0_1 = arith.constant 0 : index
    %c0_2 = arith.constant 0 : index
    %4 = vector.load %arg2[%c0_1, %c0_2] : memref<2x1024xf32, #tpu.memory_space<vmem>>, vector<2x1024xf32>
    tpu.vector_store %arg2[%c0_1, %c0_2], %3 {strides = array<i32>} : memref<2x1024xf32, #tpu.memory_space<vmem>>, vector<2x1024xf32>,
    return
  }
  func.func @transform_0(%arg0: i32) -> (i32, i32) {
    %c0_i32 = arith.constant 0 : i32
    %c0_i32_0 = arith.constant 0 : i32
    return %arg0, %c0_i32 : i32, i32
  }
  func.func @transform_1(%arg0: i32) -> (i32, i32) {
    %c0_i32 = arith.constant 0 : i32
    %c0_i32_0 = arith.constant 0 : i32
    return %arg0, %c0_i32 : i32, i32
  }
}

</mosaic_0001>

<llo_original>
// kernel: tpu_custom_call.1
$region0: #{tpu_custom_call.1}
  #allocation0 [shape = 'u32[]', space=smem, size = 0x4, offset = 0x4, fixed_abs, tag = 'smem constant byte address 0x4 - core index']
  #allocation1 [shape = 'u32[144,128]{1,0:T(1,128)}', space=vmem, size = 0x12000, scoped, tag = 'internal scratch']
  %s0 = inlined_call_operand.hbm [shape: f32[2,1024], index: 0, kind: input, shape index: {}]
  %s1 = inlined_call_operand.hbm [shape: f32[2,1024], index: 1, kind: output, shape index: {}]
  %s2 = sld [smem:[#allocation0]]
  $region18: #{tpu_custom_call.1} parent=0
    _
  %s4 = ssub.s32 1, %s2
  %s5 = scalar_select 0, %s4, %s2
  $region1: #{tpu_custom_call.1} parent=0
    #allocation2 [shape = 'u8[8192]{0}', space=vmem, size = 0x2000, scoped, tag = 'input window, operand 0, single buffered']
    #allocation3 [shape = 's32[1]{0}', space=sflag, size = 0x4, scoped, tag = 'scoped memory for tpu_custom_call.1']
    #allocation4 [shape = 's32[1]{0}', space=sflag, size = 0x4, scoped, tag = 'scoped memory for tpu_custom_call.1']
    #allocation5 [shape = 'u8[8192]{0}', space=vmem, size = 0x2000, scoped, tag = 'output window, operand 0, single buffered']
    %6 = vsyncpa [#allocation3], 0
    %7 = vsyncpa [#allocation4], 0
    // Predicated region
    $region2: #{tpu_custom_call.1} parent=1 // pred_check
      _
    $region3: #{tpu_custom_call.1} parent=1 // pred_check_branch
      %9 = sbr.rel (0) target = $region5
    $region4: #{tpu_custom_call.1} parent=1 // pred_region
      %s11 = ssub.s32 256, 256
      %12 = vsyncadd [#allocation3], %s11
      %s14 = sshll.u32 [#allocation2], 4
      %s15 = int_to_ptr.vmem [resolvable:$true] %s14
      %17 = dma.hbm_to_vmem [thread:$0]  %s0, 256, %s15, [#allocation3]
    $region5: #{tpu_custom_call.1} parent=1 // pred_fallthru
      _
    // Predicated region
    $region6: #{tpu_custom_call.1} parent=1 // pred_check
      _
    $region7: #{tpu_custom_call.1} parent=1 // pred_check_branch
      %19 = sbr.rel (0) target = $region9
    $region8: #{tpu_custom_call.1} parent=1 // pred_region
      %20 = dma.done [#allocation3], 256
    $region9: #{tpu_custom_call.1} parent=1 // pred_fallthru
      _
    %v21 = vld [vmem:[#allocation2] sm:$0xff]
    %v22 = vld [vmem:[#allocation2 + $0x8] sm:$0xff]
    %v23 = vmax.f32 %v21, 0.0
    %v24 = vmax.f32 %v22, 0.0
    %v25 = vmul.f32 %v23, %v23
    %v26 = vmul.f32 %v24, %v24
    %27 = vst [vmem:[#allocation5] sm:$0xff] %v25
    %28 = vst [vmem:[#allocation5 + $0x8] sm:$0xff] %v26
    // Predicated region
    $region10: #{tpu_custom_call.1} parent=1 // pred_check
      _
    $region11: #{tpu_custom_call.1} parent=1 // pred_check_branch
      %30 = sbr.rel (0) target = $region13
    $region12: #{tpu_custom_call.1} parent=1 // pred_region
      %s32 = ssub.s32 256, 256
      %33 = vsyncadd [#allocation4], %s32
      %s35 = sshll.u32 [#allocation5], 4
      %s36 = int_to_ptr.vmem [resolvable:$true] %s35
      %38 = dma.vmem_to_hbm [thread:$0]  %s36, 256, %s1, [#allocation4]
    $region13: #{tpu_custom_call.1} parent=1 // pred_fallthru
      _
    // Predicated region
    $region14: #{tpu_custom_call.1} parent=1 // pred_check
      _
    $region15: #{tpu_custom_call.1} parent=1 // pred_check_branch
      %40 = sbr.rel (0) target = $region17
    $region16: #{tpu_custom_call.1} parent=1 // pred_region
      %41 = dma.done [#allocation4], 256
    $region17: #{tpu_custom_call.1} parent=1 // pred_fallthru
      _
    %42 = vsyncpa [#allocation3], 1
    %43 = vsyncpa [#allocation4], 1

</llo_original>
